<compile_context>
chip_gen: v5e
topology: v5e:2x2
jax: 0.10.0
libtpu: 0.0.40
codegen_flags: <defaults>
</compile_context>

<pallas_src>
import jax
import jax.numpy as jnp
from jax import lax
from jax.experimental import pallas as pl
from jax.experimental.pallas import tpu as pltpu


# --------------------------------------------------------------------------- #
# Kernel
# --------------------------------------------------------------------------- #
def attention_kernel(x_ref, wqkv_ref, w1_ref, w2_ref, bias_ref, o_ref):
    n = wqkv_ref.shape[0]
    bt, s, _ = x_ref.shape
    rows = bt * s

    # Merge (batch, seq) -> rows for all shared-weight stages (layout-free).
    x = x_ref[...].reshape(rows, n)                              # [rows, N]

    # Bias / LayerNorm slab rows (packed once in prepare_params):
    #   row 0: gamma  row 1: beta  row 2: bqkv  row 3: b1  row 4: b2
    gamma = bias_ref[0:1, 0:n]                                   # [1, N]
    beta  = bias_ref[1:2, 0:n]                                   # [1, N]
    bqkv  = bias_ref[2:3, 0:3 * n]                               # [1, 3N]
    b1    = bias_ref[3:4, :]                                     # [1, 4N]
    b2    = bias_ref[4:5, 0:n]                                   # [1, N]

    # --- LayerNorm (torch default eps=1e-5).  The module overwrites x, so the
    #     residual connection uses the NORMALIZED input. ---------------------
    mean = jnp.mean(x, axis=-1, keepdims=True)
    xc = x - mean
    var = jnp.mean(xc * xc, axis=-1, keepdims=True)
    xn = xc * lax.rsqrt(var + 1e-5) * gamma + beta               # [rows, N]

    # --- fused q/k/v projection: one MXU matmul over all rows ---------------
    qkv = jnp.dot(xn, wqkv_ref[...], preferred_element_type=jnp.float32) + bqkv
    q = qkv[:, 0:n].reshape(bt, s, n)        # q cols pre-scaled by 1/sqrt(N)
    k = qkv[:, n:2 * n].reshape(bt, s, n)
    v = qkv[:, 2 * n:3 * n].reshape(bt, s, n)

    # --- per-sequence scores: w[b,i,j] = sum_d k[b,i,d] * q[b,j,d] ----------
    w = jnp.einsum("bid,bjd->bij", k, q,
                   preferred_element_type=jnp.float32)           # [bt, S, S]

    # numerically stable softmax (exact reciprocal: output checked at 1e-4)
    w = w - jnp.max(w, axis=-1, keepdims=True)
    e = jnp.exp(w)
    w = e * pl.reciprocal(jnp.sum(e, axis=-1, keepdims=True), approx=False)

    h = jnp.einsum("bij,bjd->bid", w, v,
                   preferred_element_type=jnp.float32)           # [bt, S, N]
    h = h.reshape(rows, n)

    # --- MLP: Linear(N, 4N) -> LeakyReLU(0.1) -> Linear(4N, N) --------------
    h1 = jnp.dot(h, w1_ref[...], preferred_element_type=jnp.float32) + b1
    h1 = jnp.where(h1 > 0, h1, 0.1 * h1)
    h2 = jnp.dot(h1, w2_ref[...], preferred_element_type=jnp.float32) + b2

    out = h2 + xn                                                # residual on normed x
    o_ref[...] = out.reshape(o_ref.shape)


# --------------------------------------------------------------------------- #
# Parameter packing (done ONCE, outside the per-call path)
# --------------------------------------------------------------------------- #
def prepare_params(params, n):
    """Fold the 1/sqrt(N) score scale into the q projection and lay weights out
    as clean, separate arrays plus one lane-aligned [8, 4N] bias/LN slab."""
    scale = 1.0 / float(n) ** 0.5
    wqkv = jnp.concatenate(
        [params["wq"] * scale, params["wk"], params["wv"]], axis=1)   # [N, 3N]
    bqkv = jnp.concatenate(
        [params["bq"] * scale, params["bk"], params["bv"]], axis=1)   # [1, 3N]

    bias = jnp.zeros((8, 4 * n), jnp.float32)
    bias = bias.at[0, 0:n].set(params["gamma"][0])
    bias = bias.at[1, 0:n].set(params["beta"][0])
    bias = bias.at[2, 0:3 * n].set(bqkv[0])
    bias = bias.at[3, :].set(params["b1"][0])
    bias = bias.at[4, 0:n].set(params["b2"][0])

    return dict(
        wqkv=wqkv.astype(jnp.float32),
        w1=params["w1"].astype(jnp.float32),
        w2=params["w2"].astype(jnp.float32),
        bias=bias,
    )


def _pick_block_b(batch, seq):
    """Largest divisor of `batch` giving ~<=1024 rows per block (fits the
    default VMEM limits on every generation, fills the MXU M-dim)."""
    bb = max(1, min(batch, max(1, 1024 // max(seq, 1))))
    while batch % bb:
        bb -= 1
    return bb


# --------------------------------------------------------------------------- #
# Wrapper
# --------------------------------------------------------------------------- #
def attention_forward(x, packed, *, block_b=None):
    """x: [B, S, N] or [S, N] float32.  packed: output of prepare_params."""
    squeeze = x.ndim == 2
    if squeeze:
        x = x[None]
    B, S, N = x.shape
    assert packed["wqkv"].shape == (N, 3 * N)

    if block_b is None:
        block_b = _pick_block_b(B, S)
    assert B % block_b == 0
    grid = (B // block_b,)

    flops = 2 * B * S * (N * 3 * N + S * N + S * N + N * 4 * N + 4 * N * N)
    transcendentals = B * S * (S + 1)
    bytes_accessed = 4 * (2 * B * S * N
                          + N * 3 * N + N * 4 * N + 4 * N * N + 8 * 4 * N)

    out = pl.pallas_call(
        attention_kernel,
        out_shape=jax.ShapeDtypeStruct((B, S, N), jnp.float32),
        grid=grid,
        in_specs=[
            pl.BlockSpec((block_b, S, N), lambda b: (b, 0, 0)),   # x: batch-blocked
            pl.BlockSpec((N, 3 * N), lambda b: (0, 0)),           # wqkv: resident
            pl.BlockSpec((N, 4 * N), lambda b: (0, 0)),           # w1:   resident
            pl.BlockSpec((4 * N, N), lambda b: (0, 0)),           # w2:   resident
            pl.BlockSpec((8, 4 * N), lambda b: (0, 0)),           # bias: resident
        ],
        out_specs=pl.BlockSpec((block_b, S, N), lambda b: (b, 0, 0)),
        compiler_params=pltpu.CompilerParams(
            dimension_semantics=("parallel",),        # shards over v7x's 2 TCs
            vmem_limit_bytes=32 * 1024 * 1024,
        ),
        cost_estimate=pl.CostEstimate(
            flops=flops,
            transcendentals=transcendentals,
            bytes_accessed=bytes_accessed,
        ),
    )(x, packed["wqkv"], packed["w1"], packed["w2"], packed["bias"])

    return out[0] if squeeze else out


# --------------------------------------------------------------------------- #
# Pure-JAX reference + synthetic params
# --------------------------------------------------------------------------- #
def _reference(x, p):
    """Pure-JAX reference mirroring the PyTorch forward pass (2-D x)."""
    mean = jnp.mean(x, axis=-1, keepdims=True)
    var = jnp.mean((x - mean) ** 2, axis=-1, keepdims=True)
    xn = (x - mean) / jnp.sqrt(var + 1e-5) * p["gamma"] + p["beta"]
    v = xn @ p["wv"] + p["bv"]
    k = xn @ p["wk"] + p["bk"]
    q = xn @ p["wq"] + p["bq"]
    w = (k @ q.T) / jnp.sqrt(jnp.float32(k.shape[-1]))
    w = jax.nn.softmax(w, axis=-1)
    h = w @ v
    h1 = h @ p["w1"] + p["b1"]
    h1 = jnp.where(h1 > 0, h1, 0.1 * h1)
    return h1 @ p["w2"] + p["b2"] + xn


def make_params(key, n):
    """Deterministic synthetic parameters (shapes match nn.Module __init__)."""
    keys = jax.random.split(key, 12)
    s = 0.1

    def lin(kw, kb, fan_in, fan_out):
        # stored as [in, out] (already transposed vs. torch's [out, in])
        w = s * jax.random.normal(kw, (fan_in, fan_out), jnp.float32)
        b = s * jax.random.normal(kb, (1, fan_out), jnp.float32)
        return w, b

    wv, bv = lin(keys[0], keys[1], n, n)
    wk, bk = lin(keys[2], keys[3], n, n)
    wq, bq = lin(keys[4], keys[5], n, n)
    w1, b1 = lin(keys[6], keys[7], n, 4 * n)
    w2, b2 = lin(keys[8], keys[9], 4 * n, n)
    gamma = 1.0 + s * jax.random.normal(keys[10], (1, n), jnp.float32)
    beta = s * jax.random.normal(keys[11], (1, n), jnp.float32)
    return dict(wv=wv, bv=bv, wk=wk, bk=bk, wq=wq, bq=bq,
                w1=w1, b1=b1, w2=w2, b2=b2, gamma=gamma, beta=beta)


if __name__ == "__main__":
    B, S, N = 16, 8, 32                 # small batch of sequences, hidden=32
    key = jax.random.PRNGKey(0)
    kx, kp = jax.random.split(key)
    x = jax.random.normal(kx, (B, S, N), jnp.float32)
    params = make_params(kp, N)
    packed = prepare_params(params, N)  # packed ONCE, reused across calls

    # Batched run with grid=(4,): exercises the resident-weight pipeline.
    out = jax.block_until_ready(attention_forward(x, packed, block_b=4))
    ref = jax.vmap(lambda xi: _reference(xi, params))(x)
    assert out.shape == (B, S, N)
    assert jnp.allclose(out, ref, atol=1e-4, rtol=1e-4), "batched mismatch vs reference"

    # Single-sequence 2-D path: exactly the module's forward signature.
    out2 = jax.block_until_ready(attention_forward(x[0], packed))
    assert out2.shape == (S, N)
    assert jnp.allclose(out2, _reference(x[0], params), atol=1e-4, rtol=1e-4), \
        "2-D mismatch vs reference"

    print("KERNEL_OK")
</pallas_src>

<mosaic_0001>
module attributes {stable_mosaic.version = 11 : i64} {
  func.func @attention_kernel(%arg0: i32, %arg1: memref<4x8x32xf32, #tpu.memory_space<vmem>>, %arg2: memref<32x96xf32, #tpu.memory_space<vmem>>, %arg3: memref<32x128xf32, #tpu.memory_space<vmem>>, %arg4: memref<128x32xf32, #tpu.memory_space<vmem>>, %arg5: memref<8x128xf32, #tpu.memory_space<vmem>>, %arg6: memref<4x8x32xf32, #tpu.memory_space<vmem>>) attributes {dimension_semantics = [#tpu.dimension_semantics<parallel>], iteration_bounds = array<i64: 4>, scalar_prefetch = 0 : i64, scratch_operands = 0 : i64, tpu.core_type = #tpu.core_type<tc>, window_params = [{transform_indices = @transform_0, window_bounds = array<i64: 4, 8, 32>}, {pipeline_mode = #tpu.pipeline_mode<synchronous>, transform_indices = @transform_1, window_bounds = array<i64: 32, 96>}, {pipeline_mode = #tpu.pipeline_mode<synchronous>, transform_indices = @transform_2, window_bounds = array<i64: 32, 128>}, {pipeline_mode = #tpu.pipeline_mode<synchronous>, transform_indices = @transform_3, window_bounds = array<i64: 128, 32>}, {pipeline_mode = #tpu.pipeline_mode<synchronous>, transform_indices = @transform_4, window_bounds = array<i64: 8, 128>}, {transform_indices = @transform_5, window_bounds = array<i64: 4, 8, 32>}]} {
    %c0 = arith.constant 0 : index
    %c0_0 = arith.constant 0 : index
    %c0_1 = arith.constant 0 : index
    %0 = vector.load %arg1[%c0, %c0_0, %c0_1] : memref<4x8x32xf32, #tpu.memory_space<vmem>>, vector<4x8x32xf32>
    %1 = vector.shape_cast %0 : vector<4x8x32xf32> to vector<32x32xf32>
    %c0_2 = arith.constant 0 : index
    %c0_3 = arith.constant 0 : index
    %2 = vector.load %arg5[%c0_2, %c0_3] : memref<8x128xf32, #tpu.memory_space<vmem>>, vector<1x32xf32>
    %c1 = arith.constant 1 : index
    %c0_4 = arith.constant 0 : index
    %3 = vector.load %arg5[%c1, %c0_4] : memref<8x128xf32, #tpu.memory_space<vmem>>, vector<1x32xf32>
    %c2 = arith.constant 2 : index
    %c0_5 = arith.constant 0 : index
    %4 = vector.load %arg5[%c2, %c0_5] : memref<8x128xf32, #tpu.memory_space<vmem>>, vector<1x96xf32>
    %c3 = arith.constant 3 : index
    %c0_6 = arith.constant 0 : index
    %5 = vector.load %arg5[%c3, %c0_6] : memref<8x128xf32, #tpu.memory_space<vmem>>, vector<1x128xf32>
    %c4 = arith.constant 4 : index
    %c0_7 = arith.constant 0 : index
    %6 = vector.load %arg5[%c4, %c0_7] : memref<8x128xf32, #tpu.memory_space<vmem>>, vector<1x32xf32>
    %cst = arith.constant dense<0.000000e+00> : vector<32xf32>
    %7 = vector.multi_reduction <add>, %1, %cst [1] : vector<32x32xf32> to vector<32xf32>
    %8 = vector.shape_cast %7 : vector<32xf32> to vector<32x1xf32>
    %cst_8 = arith.constant 3.200000e+01 : f32
    %9 = vector.broadcast %cst_8 : f32 to vector<32x1xf32>
    %10 = arith.divf %8, %9 : vector<32x1xf32>
    %11 = vector.broadcast %10 : vector<32x1xf32> to vector<32x32xf32>
    %12 = arith.subf %1, %11 : vector<32x32xf32>
    %13 = arith.mulf %12, %12 : vector<32x32xf32>
    %cst_9 = arith.constant dense<0.000000e+00> : vector<32xf32>
    %14 = vector.multi_reduction <add>, %13, %cst_9 [1] : vector<32x32xf32> to vector<32xf32>
    %15 = vector.shape_cast %14 : vector<32xf32> to vector<32x1xf32>
    %cst_10 = arith.constant 3.200000e+01 : f32
    %16 = vector.broadcast %cst_10 : f32 to vector<32x1xf32>
    %17 = arith.divf %15, %16 : vector<32x1xf32>
    %cst_11 = arith.constant 9.99999974E-6 : f32
    %18 = vector.broadcast %cst_11 : f32 to vector<32x1xf32>
    %19 = arith.addf %17, %18 : vector<32x1xf32>
    %20 = math.rsqrt %19 : vector<32x1xf32>
    %21 = vector.broadcast %20 : vector<32x1xf32> to vector<32x32xf32>
    %22 = arith.mulf %12, %21 : vector<32x32xf32>
    %23 = vector.broadcast %2 : vector<1x32xf32> to vector<32x32xf32>
    %24 = arith.mulf %22, %23 : vector<32x32xf32>
    %25 = vector.broadcast %3 : vector<1x32xf32> to vector<32x32xf32>
    %26 = arith.addf %24, %25 : vector<32x32xf32>
    %c0_12 = arith.constant 0 : index
    %c0_13 = arith.constant 0 : index
    %27 = vector.load %arg2[%c0_12, %c0_13] : memref<32x96xf32, #tpu.memory_space<vmem>>, vector<32x96xf32>
    %cst_14 = arith.constant dense<0.000000e+00> : vector<32x96xf32>
    %28 = tpu.matmul %26, %27, %cst_14 {dimension_numbers = #tpu.dot_dimension_numbers<[1], [0], [0], [1], [0, 0, 1, 1], [], []>} : vector<32x32xf32>, vector<32x96xf32>, vector<32x96xf32> -> vector<32x96xf32>
    %29 = vector.broadcast %4 : vector<1x96xf32> to vector<32x96xf32>
    %30 = arith.addf %28, %29 : vector<32x96xf32>
    %31 = vector.extract_strided_slice %30 {offsets = [0, 0], sizes = [32, 32], strides = [1, 1]} : vector<32x96xf32> to vector<32x32xf32>
    %32 = vector.shape_cast %31 : vector<32x32xf32> to vector<4x8x32xf32>
    %33 = vector.extract_strided_slice %30 {offsets = [0, 32], sizes = [32, 32], strides = [1, 1]} : vector<32x96xf32> to vector<32x32xf32>
    %34 = vector.shape_cast %33 : vector<32x32xf32> to vector<4x8x32xf32>
    %35 = vector.extract_strided_slice %30 {offsets = [0, 64], sizes = [32, 32], strides = [1, 1]} : vector<32x96xf32> to vector<32x32xf32>
    %36 = vector.shape_cast %35 : vector<32x32xf32> to vector<4x8x32xf32>
    "tpu.trace_start"() <{level = 10 : i32, message = "bid,bjd->bij"}> : () -> ()
    %cst_15 = arith.constant dense<0.000000e+00> : vector<4x8x8xf32>
    %37 = tpu.matmul %34, %32, %cst_15 {dimension_numbers = #tpu.dot_dimension_numbers<[2], [2], [1], [1], [0, 0, 0, 1, 1, 1], [0], [0]>} : vector<4x8x32xf32>, vector<4x8x32xf32>, vector<4x8x8xf32> -> vector<4x8x8xf32>
    "tpu.trace_stop"() : () -> ()
    %cst_16 = arith.constant dense<0xFF800000> : vector<4x8xf32>
    %38 = vector.multi_reduction <maximumf>, %37, %cst_16 [2] : vector<4x8x8xf32> to vector<4x8xf32>
    %39 = vector.shape_cast %38 : vector<4x8xf32> to vector<4x8x1xf32>
    %40 = vector.broadcast %39 : vector<4x8x1xf32> to vector<4x8x8xf32>
    %41 = arith.subf %37, %40 : vector<4x8x8xf32>
    %42 = math.exp %41 : vector<4x8x8xf32>
    %cst_17 = arith.constant dense<0.000000e+00> : vector<4x8xf32>
    %43 = vector.multi_reduction <add>, %42, %cst_17 [2] : vector<4x8x8xf32> to vector<4x8xf32>
    %44 = vector.shape_cast %43 : vector<4x8xf32> to vector<4x8x1xf32>
    %45 = tpu.reciprocal %44 : vector<4x8x1xf32> -> vector<4x8x1xf32>
    %46 = vector.broadcast %45 : vector<4x8x1xf32> to vector<4x8x8xf32>
    %47 = arith.mulf %42, %46 : vector<4x8x8xf32>
    "tpu.trace_start"() <{level = 10 : i32, message = "bij,bjd->bid"}> : () -> ()
    %cst_18 = arith.constant dense<0.000000e+00> : vector<4x8x32xf32>
    %48 = tpu.matmul %47, %36, %cst_18 {dimension_numbers = #tpu.dot_dimension_numbers<[2], [1], [1], [2], [0, 0, 0, 1, 1, 2], [0], [0]>} : vector<4x8x8xf32>, vector<4x8x32xf32>, vector<4x8x32xf32> -> vector<4x8x32xf32>
    "tpu.trace_stop"() : () -> ()
    %49 = vector.shape_cast %48 : vector<4x8x32xf32> to vector<32x32xf32>
    %c0_19 = arith.constant 0 : index
    %c0_20 = arith.constant 0 : index
    %50 = vector.load %arg3[%c0_19, %c0_20] : memref<32x128xf32, #tpu.memory_space<vmem>>, vector<32x128xf32>
    %cst_21 = arith.constant dense<0.000000e+00> : vector<32x128xf32>
    %51 = tpu.matmul %49, %50, %cst_21 {dimension_numbers = #tpu.dot_dimension_numbers<[1], [0], [0], [1], [0, 0, 1, 1], [], []>} : vector<32x32xf32>, vector<32x128xf32>, vector<32x128xf32> -> vector<32x128xf32>
    %52 = vector.broadcast %5 : vector<1x128xf32> to vector<32x128xf32>
    %53 = arith.addf %51, %52 : vector<32x128xf32>
    %cst_22 = arith.constant 0.000000e+00 : f32
    %54 = vector.broadcast %cst_22 : f32 to vector<32x128xf32>
    %55 = arith.cmpf ogt, %53, %54 : vector<32x128xf32>
    %cst_23 = arith.constant 1.000000e-01 : f32
    %56 = vector.broadcast %cst_23 : f32 to vector<32x128xf32>
    %57 = arith.mulf %56, %53 : vector<32x128xf32>
    %58 = arith.select %55, %53, %57 : vector<32x128xi1>, vector<32x128xf32>
    %c0_24 = arith.constant 0 : index
    %c0_25 = arith.constant 0 : index
    %59 = vector.load %arg4[%c0_24, %c0_25] : memref<128x32xf32, #tpu.memory_space<vmem>>, vector<128x32xf32>
    %cst_26 = arith.constant dense<0.000000e+00> : vector<32x32xf32>
    %60 = tpu.matmul %58, %59, %cst_26 {dimension_numbers = #tpu.dot_dimension_numbers<[1], [0], [0], [1], [0, 0, 1, 1], [], []>} : vector<32x128xf32>, vector<128x32xf32>, vector<32x32xf32> -> vector<32x32xf32>
    %61 = vector.broadcast %6 : vector<1x32xf32> to vector<32x32xf32>
    %62 = arith.addf %60, %61 : vector<32x32xf32>
    %63 = arith.addf %62, %26 : vector<32x32xf32>
    %64 = vector.shape_cast %63 : vector<32x32xf32> to vector<4x8x32xf32>
    %c0_27 = arith.constant 0 : index
    %c0_28 = arith.constant 0 : index
    %c0_29 = arith.constant 0 : index
    %65 = vector.load %arg6[%c0_27, %c0_28, %c0_29] : memref<4x8x32xf32, #tpu.memory_space<vmem>>, vector<4x8x32xf32>
    tpu.vector_store %arg6[%c0_27, %c0_28, %c0_29], %64 {strides = array<i32>} : memref<4x8x32xf32, #tpu.memory_space<vmem>>, vector<4x8x32xf32>,
    return
  }
  func.func @transform_0(%arg0: i32) -> (i32, i32, i32) {
    %c0_i32 = arith.constant 0 : i32
    %c0_i32_0 = arith.constant 0 : i32
    %c0_i32_1 = arith.constant 0 : i32
    return %arg0, %c0_i32, %c0_i32_0 : i32, i32, i32
  }
  func.func @transform_1(%arg0: i32) -> (i32, i32) {
    %c0_i32 = arith.constant 0 : i32
    %c0_i32_0 = arith.constant 0 : i32
    %c0_i32_1 = arith.constant 0 : i32
    return %c0_i32, %c0_i32_0 : i32, i32
  }
  func.func @transform_2(%arg0: i32) -> (i32, i32) {
    %c0_i32 = arith.constant 0 : i32
    %c0_i32_0 = arith.constant 0 : i32
    %c0_i32_1 = arith.constant 0 : i32
    return %c0_i32, %c0_i32_0 : i32, i32
  }
  func.func @transform_3(%arg0: i32) -> (i32, i32) {
    %c0_i32 = arith.constant 0 : i32
    %c0_i32_0 = arith.constant 0 : i32
    %c0_i32_1 = arith.constant 0 : i32
    return %c0_i32, %c0_i32_0 : i32, i32
  }
  func.func @transform_4(%arg0: i32) -> (i32, i32) {
    %c0_i32 = arith.constant 0 : i32
    %c0_i32_0 = arith.constant 0 : i32
    %c0_i32_1 = arith.constant 0 : i32
    return %c0_i32, %c0_i32_0 : i32, i32
  }
  func.func @transform_5(%arg0: i32) -> (i32, i32, i32) {
    %c0_i32 = arith.constant 0 : i32
    %c0_i32_0 = arith.constant 0 : i32
    %c0_i32_1 = arith.constant 0 : i32
    return %arg0, %c0_i32, %c0_i32_0 : i32, i32, i32
  }
}

</mosaic_0001>

<llo_original>
// kernel: tpu_custom_call.1
$region0: #{tpu_custom_call.1}
  #allocation0 [shape = 'u32[]', space=smem, size = 0x4, offset = 0x4, fixed_abs, tag = 'smem constant byte address 0x4 - core index']
  #allocation1 [shape = 'u32[72,128]{1,0:T(1,128)}', space=vmem, size = 0x9000, scoped, tag = 'internal scratch']
  %s0 = inlined_call_operand.vmem [shape: f32[16,8,32], index: 0, kind: input, shape index: {}]
  %s1 = inlined_call_operand.vmem [shape: f32[32,96], index: 1, kind: input, shape index: {}]
  %s2 = inlined_call_operand.hbm [shape: f32[32,128], index: 2, kind: input, shape index: {}]
  %s3 = inlined_call_operand.vmem [shape: f32[128,32], index: 3, kind: input, shape index: {}]
  %s4 = inlined_call_operand.hbm [shape: f32[8,128], index: 4, kind: input, shape index: {}]
  %s5 = inlined_call_operand.hbm [shape: f32[16,8,32], index: 5, kind: output, shape index: {}]
  %s6 = sld [smem:[#allocation0]]
  $region61: #{tpu_custom_call.1} parent=0
    _
  %s8 = ssub.s32 1, %s6
  %s9 = scalar_select 0, %s8, %s6
  $region1: #{tpu_custom_call.1} parent=0
    #allocation2 [shape = 'u8[16384]{0}', space=vmem, size = 0x4000, scoped, tag = 'input window, operand 2, single buffered']
    #allocation3 [shape = 's32[2]{0}', space=sflag, size = 0x8, scoped, tag = 'scoped memory for tpu_custom_call.1']
    #allocation4 [shape = 's32[2]{0}', space=sflag, size = 0x8, scoped, tag = 'scoped memory for tpu_custom_call.1']
    #allocation5 [shape = 'u8[4096]{0}', space=vmem, size = 0x1000, scoped, tag = 'input window, operand 4, single buffered']
    #allocation6 [shape = 's32[1]{0}', space=sflag, size = 0x4, scoped, tag = 'scoped memory for tpu_custom_call.1']
    #allocation7 [shape = 'u8[32768]{0}', space=vmem, size = 0x8000, scoped, tag = 'output window, operand 0']
    %10 = vsyncpa [#allocation3], 0
    %11 = vsyncpa [#allocation6], 0
    %12 = vsyncpa [#allocation4], 0
    %s13 = scalar_lea.sflag [#allocation4], 1
    %14 = vsyncpa %s13, 0
    loop: start=0, step=1, limit=6
    $region2: #{tpu_custom_call.1} parent=1 // loop_pre_header
      _
    $region3: #{tpu_custom_call.1} parent=1 // loop_header
      %s16 = sphi 0, %s20
      %p17 = scmp.ge.s32.totalorder %s16, 6
      %s26 = sphi 0, %s28
      %s29 = sphi 0, %s26
      %s30 = sphi 0, %s29
      %s46 = sphi 0, %s30
      %s50 = sphi 0, %s50
      %s52 = sphi 0, %s50
      %s53 = sphi 0, %s52
      %s67 = sphi 0, %s53
      %s71 = sphi 0, %s71
      %s73 = sphi 0, %s71
      %s74 = sphi 0, %s73
      %s88 = sphi 0, %s74
      %s92 = sphi 0, %s92
      %s94 = sphi 0, %s92
      %s95 = sphi 0, %s94
      %s109 = sphi 0, %s95
      %s113 = sphi 0, %s113
      %s115 = sphi 0, %s113
      %s116 = sphi 0, %s115
      %s130 = sphi 0, %s116
      %s136 = sphi 0, %s138
      %s139 = sphi 0, %s136
      %s140 = sphi 0, %s139
      %s156 = sphi 0, %s140
    $region4: #{tpu_custom_call.1} parent=1 // loop_header_branch
      %19 = sbr.rel (%p17) target = $region8
    $region5: #{tpu_custom_call.1} parent=1 // loop_body
      %s21 = ssub.s32 %s16, 1
      %s22 = ssub.s32 %s16, 2
      %s23 = sadd.s32 %s16, 1
      %s24 = ssub.s32 %s16, %s23
      %p25 = scmp.eq.s32.totalorder %s24, 0
      %s27 = sadd.s32 %s26, 1
      %s28 = scalar_select %p25, %s26, %s27
      %p31 = pneg %p25
      %p32 = scmp.eq.s32.totalorder %s16, 3
      %p33 = por %p31, %p32
      %p34 = scmp.ne.s32.totalorder %s26, %s29
      %p35 = scmp.eq.s32.totalorder %s16, 0
      %p36 = por %p34, %p35
      %p37 = scmp.ne.s32.totalorder %s26, %s29
      %p38 = scmp.eq.s32.totalorder %s21, 3
      %p39 = por %p37, %p38
      %p40 = scmp.ne.s32.totalorder %s29, %s30
      %p41 = scmp.eq.s32.totalorder %s21, 0
      %p42 = por %p40, %p41
      %p43 = scmp.ne.s32.totalorder %s29, %s30
      %p44 = scmp.eq.s32.totalorder %s22, 3
      %p45 = por %p43, %p44
      %p47 = scmp.ne.s32.totalorder %s30, %s46
      %p48 = scmp.eq.s32.totalorder %s22, 0
      %p49 = por %p47, %p48
      %s51 = sadd.s32 %s50, 1
      %p54 = scmp.eq.s32.totalorder %s16, 3
      %p55 = scmp.ne.s32.totalorder %s50, %s52
      %p56 = scmp.eq.s32.totalorder %s16, 0
      %p57 = por %p55, %p56
      %p58 = scmp.ne.s32.totalorder %s50, %s52
      %p59 = scmp.eq.s32.totalorder %s21, 3
      %p60 = por %p58, %p59
      %p61 = scmp.ne.s32.totalorder %s52, %s53
      %p62 = scmp.eq.s32.totalorder %s21, 0
      %p63 = por %p61, %p62
      %p64 = scmp.ne.s32.totalorder %s52, %s53
      %p65 = scmp.eq.s32.totalorder %s22, 3
      %p66 = por %p64, %p65
      %p68 = scmp.ne.s32.totalorder %s53, %s67
      %p69 = scmp.eq.s32.totalorder %s22, 0
      %p70 = por %p68, %p69
      %s72 = sadd.s32 %s71, 1
      %p75 = scmp.eq.s32.totalorder %s16, 3
      %p76 = scmp.ne.s32.totalorder %s71, %s73
      %p77 = scmp.eq.s32.totalorder %s16, 0
      %p78 = por %p76, %p77
      %p79 = scmp.ne.s32.totalorder %s71, %s73
      %p80 = scmp.eq.s32.totalorder %s21, 3
      %p81 = por %p79, %p80
      %p82 = scmp.ne.s32.totalorder %s73, %s74
      %p83 = scmp.eq.s32.totalorder %s21, 0
      %p84 = por %p82, %p83
      %p85 = scmp.ne.s32.totalorder %s73, %s74
      %p86 = scmp.eq.s32.totalorder %s22, 3
      %p87 = por %p85, %p86
      %p89 = scmp.ne.s32.totalorder %s74, %s88
      %p90 = scmp.eq.s32.totalorder %s22, 0
      %p91 = por %p89, %p90
      %s93 = sadd.s32 %s92, 1
      %p96 = scmp.eq.s32.totalorder %s16, 3
      %p97 = scmp.ne.s32.totalorder %s92, %s94
      %p98 = scmp.eq.s32.totalorder %s16, 0
      %p99 = por %p97, %p98
      %p100 = scmp.ne.s32.totalorder %s92, %s94
      %p101 = scmp.eq.s32.totalorder %s21, 3
      %p102 = por %p100, %p101
      %p103 = scmp.ne.s32.totalorder %s94, %s95
      %p104 = scmp.eq.s32.totalorder %s21, 0
      %p105 = por %p103, %p104
      %p106 = scmp.ne.s32.totalorder %s94, %s95
      %p107 = scmp.eq.s32.totalorder %s22, 3
      %p108 = por %p106, %p107
      %p110 = scmp.ne.s32.totalorder %s95, %s109
      %p111 = scmp.eq.s32.totalorder %s22, 0
      %p112 = por %p110, %p111
      %s114 = sadd.s32 %s113, 1
      %p117 = scmp.eq.s32.totalorder %s16, 3
      %p118 = scmp.ne.s32.totalorder %s113, %s115
      %p119 = scmp.eq.s32.totalorder %s16, 0
      %p120 = por %p118, %p119
      %p121 = scmp.ne.s32.totalorder %s113, %s115
      %p122 = scmp.eq.s32.totalorder %s21, 3
      %p123 = por %p121, %p122
      %p124 = scmp.ne.s32.totalorder %s115, %s116
      %p125 = scmp.eq.s32.totalorder %s21, 0
      %p126 = por %p124, %p125
      %p127 = scmp.ne.s32.totalorder %s115, %s116
      %p128 = scmp.eq.s32.totalorder %s22, 3
      %p129 = por %p127, %p128
      %p131 = scmp.ne.s32.totalorder %s116, %s130
      %p132 = scmp.eq.s32.totalorder %s22, 0
      %p133 = por %p131, %p132
      %s134 = ssub.s32 %s16, %s23
      %p135 = scmp.eq.s32.totalorder %s134, 0
      %s137 = sadd.s32 %s136, 1
      %s138 = scalar_select %p135, %s136, %s137
      %p141 = pneg %p135
      %p142 = scmp.eq.s32.totalorder %s16, 3
      %p143 = por %p141, %p142
      %p144 = scmp.ne.s32.totalorder %s136, %s139
      %p145 = scmp.eq.s32.totalorder %s16, 0
      %p146 = por %p144, %p145
      %p147 = scmp.ne.s32.totalorder %s136, %s139
      %p148 = scmp.eq.s32.totalorder %s21, 3
      %p149 = por %p147, %p148
      %p150 = scmp.ne.s32.totalorder %s139, %s140
      %p151 = scmp.eq.s32.totalorder %s21, 0
      %p152 = por %p150, %p151
      %p153 = scmp.ne.s32.totalorder %s139, %s140
      %p154 = scmp.eq.s32.totalorder %s22, 3
      %p155 = por %p153, %p154
      %p157 = scmp.ne.s32.totalorder %s140, %s156
      %p158 = scmp.eq.s32.totalorder %s22, 0
      %p159 = por %p157, %p158
      %p160 = scmp.le.s32.totalorder 1, %s16
      %p161 = scmp.lt.s32.totalorder %s16, 5
      %p162 = pnand %p160, %p161
      %p163 = pneg %p162
      // Predicated region
      $region9: #{tpu_custom_call.1} parent=5 // pred_check
        _
      $region10: #{tpu_custom_call.1} parent=5 // pred_check_branch
        %165 = sbr.rel (%p162) target = $region12
      $region11: #{tpu_custom_call.1} parent=5 // pred_region
        %s166 = ssub.s32 %s16, 1
        // Predicated region
        $region13: #{tpu_custom_call.1} parent=11 // pred_check
          %p167 = pneg %p63
        $region14: #{tpu_custom_call.1} parent=11 // pred_check_branch
          %169 = sbr.rel (%p167) target = $region16
        $region15: #{tpu_custom_call.1} parent=11 // pred_region
          _
        $region16: #{tpu_custom_call.1} parent=11 // pred_fallthru
          _
        // Predicated region
        $region17: #{tpu_custom_call.1} parent=11 // pred_check
          %p170 = pneg %p84
        $region18: #{tpu_custom_call.1} parent=11 // pred_check_branch
          %172 = sbr.rel (%p170) target = $region20
        $region19: #{tpu_custom_call.1} parent=11 // pred_region
          %174 = vsyncadd [#allocation3], 0
          %s175 = sshll.u32 %s2, 4
          %s176 = int_to_ptr.hbm [resolvable:$true] %s175
          %s177 = sshll.u32 [#allocation2], 4
          %s178 = int_to_ptr.vmem [resolvable:$true] %s177
          %183 = dma.hbm_to_vmem [thread:$0]  %s176, 512, %s178, [#allocation3], 128, 128, 8
        $region20: #{tpu_custom_call.1} parent=11 // pred_fallthru
          _
        // Predicated region
        $region21: #{tpu_custom_call.1} parent=11 // pred_check
          %p184 = pneg %p105
        $region22: #{tpu_custom_call.1} parent=11 // pred_check_branch
          %186 = sbr.rel (%p184) target = $region24
        $region23: #{tpu_custom_call.1} parent=11 // pred_region
          _
        $region24: #{tpu_custom_call.1} parent=11 // pred_fallthru
          _
        // Predicated region
        $region25: #{tpu_custom_call.1} parent=11 // pred_check
          %p187 = pneg %p126
        $region26: #{tpu_custom_call.1} parent=11 // pred_check_branch
          %189 = sbr.rel (%p187) target = $region28
        $region27: #{tpu_custom_call.1} parent=11 // pred_region
          %191 = vsyncadd [#allocation6], 0
          %s193 = sshll.u32 %s4, 4
          %s194 = int_to_ptr.hbm [resolvable:$true] %s193
          %s195 = sshll.u32 [#allocation5], 4
          %s196 = int_to_ptr.vmem [resolvable:$true] %s195
          %198 = dma.hbm_to_vmem [thread:$0]  %s194, 128, %s196, [#allocation6]
        $region28: #{tpu_custom_call.1} parent=11 // pred_fallthru
          _
      $region12: #{tpu_custom_call.1} parent=5 // pred_fallthru
        _
      %p199 = scmp.lt.s32.totalorder %s16, 4
      // Predicated region
      $region29: #{tpu_custom_call.1} parent=5 // pred_check
        %p200 = pneg %p199
      $region30: #{tpu_custom_call.1} parent=5 // pred_check_branch
        %202 = sbr.rel (%p200) target = $region32
      $region31: #{tpu_custom_call.1} parent=5 // pred_region
        // Predicated region
        $region33: #{tpu_custom_call.1} parent=31 // pred_check
          %p203 = pneg %p36
        $region34: #{tpu_custom_call.1} parent=31 // pred_check_branch
          %205 = sbr.rel (%p203) target = $region36
        $region35: #{tpu_custom_call.1} parent=31 // pred_region
          %s206 = smul.u32 4, %s16
          %p207 = scmp.lt.s32.totalorder %s206, 15
          %s208 = scalar_select %p207, %s206, 15
          %s209 = smul.addr %s208, 8
          %s210 = scalar_lea.vmem %s0, %s209
          %s211 = smul.u32 4, %s16
        $region36: #{tpu_custom_call.1} parent=31 // pred_fallthru
          _
      $region32: #{tpu_custom_call.1} parent=5 // pred_fallthru
        _
      %p212 = scmp.le.s32.totalorder 1, %s16
      %p213 = scmp.lt.s32.totalorder %s16, 5
      %p214 = pnand %p212, %p213
      %p215 = pneg %p214
      // Predicated region
      $region37: #{tpu_custom_call.1} parent=5 // pred_check
        _
      $region38: #{tpu_custom_call.1} parent=5 // pred_check_branch
        %217 = sbr.rel (%p214) target = $region40
      $region39: #{tpu_custom_call.1} parent=5 // pred_region
        %s218 = ssub.s32 %s16, 1
        // Predicated region
        $region41: #{tpu_custom_call.1} parent=39 // pred_check
          %p219 = pneg %p84
        $region42: #{tpu_custom_call.1} parent=39 // pred_check_branch
          %221 = sbr.rel (%p219) target = $region44
        $region43: #{tpu_custom_call.1} parent=39 // pred_region
          %223 = dma.done [#allocation3], 512
        $region44: #{tpu_custom_call.1} parent=39 // pred_fallthru
          _
        // Predicated region
        $region45: #{tpu_custom_call.1} parent=39 // pred_check
          %p224 = pneg %p126
        $region46: #{tpu_custom_call.1} parent=39 // pred_check_branch
          %226 = sbr.rel (%p224) target = $region48
        $region47: #{tpu_custom_call.1} parent=39 // pred_region
          %228 = dma.done [#allocation6], 128
        $region48: #{tpu_custom_call.1} parent=39 // pred_fallthru
          _
        %s229 = smul.u32 4, %s21
        %p230 = scmp.lt.s32.totalorder %s229, 15
        %s231 = scalar_select %p230, %s229, 15
        %s232 = smul.addr %s231, 8
        %s233 = scalar_lea.vmem %s0, %s232
        %p234 = pneg %p42
        %p235 = pneg %p39
        %p236 = pneg %p63
        %p237 = pneg %p60
        %p238 = pneg %p84
        %p239 = pneg %p81
        %p240 = pneg %p105
        %p241 = pneg %p102
        %p242 = pneg %p126
        %p243 = pneg %p123
        %p244 = pneg %p152
        %p245 = pneg %p149
        %s246 = sand.u32 %s139, 1
        %s247 = scalar_lea.sflag [#allocation4], %s246
        %s248 = sand.u32 %s139, 1
        %s249 = smul.addr %s248, 32
        %s250 = scalar_lea.vmem [#allocation7], %s249
        %s251 = smul.u32 4, %s21
        %p252 = scmp.lt.s32.totalorder %s251, 15
        %s253 = scalar_select %p252, %s251, 15
        %s254 = smul.addr %s253, 8
        %s255 = scalar_lea.vmem %s0, %s254
        %s256 = smul.u32 4, %s21
        %s257 = smul.u32 4, %s21
        %v258 = vld [vmem:[%s255] sm:$0xff]
        %v259 = vld [vmem:[%s255 + $0x8] sm:$0xff]
        %v260 = vld [vmem:[%s255 + $0x10] sm:$0xff]
        %v261 = vld [vmem:[%s255 + $0x18] sm:$0xff]
        %v262 = vld [vmem:[#allocation5] sm:$0x1]
        %v263 = vld [vmem:[#allocation5 + $0x1] sm:$0x1]
        %v264 = vld [vmem:[#allocation5 + $0x2] sm:$0x1]
        %v265 = vld [vmem:[#allocation5 + $0x3] sm:$0x1]
        %v266 = vld [vmem:[#allocation5 + $0x4] sm:$0x1]
        %vm267 = vcmask 261120
        %v268 = vsel %vm267, %v258, 0.0
        %269 = vadd.xlane.f32.xlu0 %v268
        %v270 = vpop.xlane.xlu0 %269
        %v271 = vsel %vm267, %v259, 0.0
        %272 = vadd.xlane.f32.xlu0 %v271
        %v273 = vpop.xlane.xlu0 %272
        %v274 = vsel %vm267, %v260, 0.0
        %275 = vadd.xlane.f32.xlu0 %v274
        %v276 = vpop.xlane.xlu0 %275
        %v277 = vsel %vm267, %v261, 0.0
        %278 = vadd.xlane.f32.xlu0 %v277
        %v279 = vpop.xlane.xlu0 %278
        %v280 = vrcp.pop 32.0
        %v281 = vmul.f32 32.0, %v280
        %v282 = vsub.f32 1.0, %v281
        %v283 = vmul.f32 %v280, %v282
        %v284 = vadd.f32 %v280, %v283
        %vm285 = vweird.f32 %v280
        %v286 = vsel %vm285, %v280, %v284
        %v287 = vmul.f32 %v270, %v286
        %v288 = vmul.f32 %v273, %v286
        %v289 = vmul.f32 %v276, %v286
        %v290 = vmul.f32 %v279, %v286
        %v291 = vsub.f32 %v258, %v287
        %v292 = vsub.f32 %v259, %v288
        %v293 = vsub.f32 %v260, %v289
        %v294 = vsub.f32 %v261, %v290
        %v295 = vmul.f32 %v291, %v291
        %v296 = vmul.f32 %v292, %v292
        %v297 = vmul.f32 %v293, %v293
        %v298 = vmul.f32 %v294, %v294
        %v299 = vsel %vm267, %v295, 0.0
        %300 = vadd.xlane.f32.xlu0 %v299
        %v301 = vpop.xlane.xlu0 %300
        %v302 = vsel %vm267, %v296, 0.0
        %303 = vadd.xlane.f32.xlu0 %v302
        %v304 = vpop.xlane.xlu0 %303
        %v305 = vsel %vm267, %v297, 0.0
        %306 = vadd.xlane.f32.xlu0 %v305
        %v307 = vpop.xlane.xlu0 %306
        %v308 = vsel %vm267, %v298, 0.0
        %309 = vadd.xlane.f32.xlu0 %v308
        %v310 = vpop.xlane.xlu0 %309
        %v311 = vmul.f32 %v301, %v286
        %v312 = vmul.f32 %v304, %v286
        %v313 = vmul.f32 %v307, %v286
        %v314 = vmul.f32 %v310, %v286
        %v315 = vadd.f32 %v311, 1e-05
        %v316 = vadd.f32 %v312, 1e-05
        %v317 = vadd.f32 %v313, 1e-05
        %v318 = vadd.f32 %v314, 1e-05
        %v319 = vrsqrt.pop %v315
        %v320 = vmul.f32 %v319, %v315
        %v321 = vmul.f32 %v320, %v319
        %v322 = vmul.f32 0.5, %v321
        %v323 = vsub.f32 1.5, %v322
        %v324 = vmul.f32 %v319, %v323
        %vm325 = vweird.f32 %v315
        %vm326 = vweird.f32 %v319
        %vm327 = vmor %vm325, %vm326
        %v328 = vsel %vm327, %v319, %v324
        %v329 = vrsqrt.pop %v316
        %v330 = vmul.f32 %v329, %v316
        %v331 = vmul.f32 %v330, %v329
        %v332 = vmul.f32 0.5, %v331
        %v333 = vsub.f32 1.5, %v332
        %v334 = vmul.f32 %v329, %v333
        %vm335 = vweird.f32 %v316
        %vm336 = vweird.f32 %v329
        %vm337 = vmor %vm335, %vm336
        %v338 = vsel %vm337, %v329, %v334
        %v339 = vrsqrt.pop %v317
        %v340 = vmul.f32 %v339, %v317
        %v341 = vmul.f32 %v340, %v339
        %v342 = vmul.f32 0.5, %v341
        %v343 = vsub.f32 1.5, %v342
        %v344 = vmul.f32 %v339, %v343
        %vm345 = vweird.f32 %v317
        %vm346 = vweird.f32 %v339
        %vm347 = vmor %vm345, %vm346
        %v348 = vsel %vm347, %v339, %v344
        %v349 = vrsqrt.pop %v318
        %v350 = vmul.f32 %v349, %v318
        %v351 = vmul.f32 %v350, %v349
        %v352 = vmul.f32 0.5, %v351
        %v353 = vsub.f32 1.5, %v352
        %v354 = vmul.f32 %v349, %v353
        %vm355 = vweird.f32 %v318
        %vm356 = vweird.f32 %v349
        %vm357 = vmor %vm355, %vm356
        %v358 = vsel %vm357, %v349, %v354
        %v359 = vmul.f32 %v291, %v328
        %v360 = vmul.f32 %v292, %v338
        %v361 = vmul.f32 %v293, %v348
        %v362 = vmul.f32 %v294, %v358
        %v363 = vperm.slane %v262, 0
        %v364 = vmul.f32 %v359, %v363
        %v365 = vmul.f32 %v360, %v363
        %v366 = vmul.f32 %v361, %v363
        %v367 = vmul.f32 %v362, %v363
        %v368 = vperm.slane %v263, 0
        %v369 = vadd.f32 %v364, %v368
        %v370 = vadd.f32 %v365, %v368
        %v371 = vadd.f32 %v366, %v368
        %v372 = vadd.f32 %v367, %v368
        %v373 = vld [vmem:[%s1] sm:$0xff]
        %v374 = vld [vmem:[%s1 + $0x8] sm:$0xff]
        %v375 = vld [vmem:[%s1 + $0x10] sm:$0xff]
        %v376 = vld [vmem:[%s1 + $0x18] sm:$0xff]
        %v377 = vperm.slane %v264, 0
        %v379 = vsel %vm267, %v369, 0
        %v382 = vsel %vm267, %v370, 0
        %v385 = vsel %vm267, %v371, 0
        %v388 = vsel %vm267, %v372, 0
        %390 = vmatpush.msra.mxu0 0.0
        %391 = vmatpush.msra.mxu0 0.0
        %392 = vmatpush.msra.mxu0 0.0
        %393 = vmatpush.msra.mxu0 0.0
        %394 = vmatpush.msra.mxu0 0.0
        %395 = vmatpush.msra.mxu0 0.0
        %396 = vmatpush.msra.mxu0 0.0
        %397 = vmatpush.msra.mxu0 0.0
        %398 = vmatpush.msra.mxu0 0.0
        %399 = vmatpush.msra.mxu0 0.0
        %400 = vmatpush.msra.mxu0 0.0
        %401 = vmatpush.msra.mxu0 0.0
        %402 = vmatpush.msra.mxu0 %v376
        %403 = vmatpush.msra.mxu0 %v375
        %404 = vmatpush.msra.mxu0 %v374
        %405 = vmatpush.msra.mxu0 %v373
        %406 = vmatmul.f32.gmra.mxu0 %v379
        %v407 = vpop.f32.mrf.mxu0
        %v408 = vadd.f32 %v377, %v407
        %409 = vmatmul.f32.gmra.mxu0 %v382
        %v410 = vpop.f32.mrf.mxu0
        %v411 = vadd.f32 %v377, %v410
        %412 = vmatmul.f32.gmra.mxu0 %v385
        %v413 = vpop.f32.mrf.mxu0
        %v414 = vadd.f32 %v377, %v413
        %415 = vmatmul.f32.gmra.mxu0 %v388
        %v416 = vpop.f32.mrf.mxu0
        %v417 = vadd.f32 %v377, %v416
        %418 = vdwg.mxu0
        %420 = vrot.lane.b32.xlu0 %v408, 96
        %v421 = vpop.permute.xlu0 %420
        %v422 = vsel %vm267, %v421, 0
        %v424 = vsel %vm267, %v408, 0
        %426 = vmatpush.xpose.msra.mxu0 0.0
        %427 = vmatpush.xpose.msra.mxu0 0.0
        %428 = vmatpush.xpose.msra.mxu0 0.0
        %429 = vmatpush.xpose.msra.mxu0 0.0
        %430 = vmatpush.xpose.msra.mxu0 0.0
        %431 = vmatpush.xpose.msra.mxu0 0.0
        %432 = vmatpush.xpose.msra.mxu0 0.0
        %433 = vmatpush.xpose.msra.mxu0 0.0
        %434 = vmatpush.xpose.msra.mxu0 0.0
        %435 = vmatpush.xpose.msra.mxu0 0.0
        %436 = vmatpush.xpose.msra.mxu0 0.0
        %437 = vmatpush.xpose.msra.mxu0 0.0
        %438 = vmatpush.xpose.msra.mxu0 0.0
        %439 = vmatpush.xpose.msra.mxu0 0.0
        %440 = vmatpush.xpose.msra.mxu0 0.0
        %441 = vmatpush.xpose.msra.mxu0 %v424
        %442 = vmatmul.f32.gmra.mxu0 %v422
        %v443 = vpop.f32.mrf.mxu0
        %v444 = vadd.f32 0.0, %v443
        %445 = vdwg.mxu0
        %447 = vrot.lane.b32.xlu0 %v411, 96
        %v448 = vpop.permute.xlu0 %447
        %v449 = vsel %vm267, %v448, 0
        %v451 = vsel %vm267, %v411, 0
        %453 = vmatpush.xpose.msra.mxu0 0.0
        %454 = vmatpush.xpose.msra.mxu0 0.0
        %455 = vmatpush.xpose.msra.mxu0 0.0
        %456 = vmatpush.xpose.msra.mxu0 0.0
        %457 = vmatpush.xpose.msra.mxu0 0.0
        %458 = vmatpush.xpose.msra.mxu0 0.0
        %459 = vmatpush.xpose.msra.mxu0 0.0
        %460 = vmatpush.xpose.msra.mxu0 0.0
        %461 = vmatpush.xpose.msra.mxu0 0.0
        %462 = vmatpush.xpose.msra.mxu0 0.0
        %463 = vmatpush.xpose.msra.mxu0 0.0
        %464 = vmatpush.xpose.msra.mxu0 0.0
        %465 = vmatpush.xpose.msra.mxu0 0.0
        %466 = vmatpush.xpose.msra.mxu0 0.0
        %467 = vmatpush.xpose.msra.mxu0 0.0
        %468 = vmatpush.xpose.msra.mxu0 %v451
        %469 = vmatmul.f32.gmra.mxu0 %v449
        %v470 = vpop.f32.mrf.mxu0
        %v471 = vadd.f32 0.0, %v470
        %472 = vdwg.mxu0
        %474 = vrot.lane.b32.xlu0 %v414, 96
        %v475 = vpop.permute.xlu0 %474
        %v476 = vsel %vm267, %v475, 0
        %v478 = vsel %vm267, %v414, 0
        %480 = vmatpush.xpose.msra.mxu0 0.0
        %481 = vmatpush.xpose.msra.mxu0 0.0
        %482 = vmatpush.xpose.msra.mxu0 0.0
        %483 = vmatpush.xpose.msra.mxu0 0.0
        %484 = vmatpush.xpose.msra.mxu0 0.0
        %485 = vmatpush.xpose.msra.mxu0 0.0
        %486 = vmatpush.xpose.msra.mxu0 0.0
        %487 = vmatpush.xpose.msra.mxu0 0.0
        %488 = vmatpush.xpose.msra.mxu0 0.0
        %489 = vmatpush.xpose.msra.mxu0 0.0
        %490 = vmatpush.xpose.msra.mxu0 0.0
        %491 = vmatpush.xpose.msra.mxu0 0.0
        %492 = vmatpush.xpose.msra.mxu0 0.0
        %493 = vmatpush.xpose.msra.mxu0 0.0
        %494 = vmatpush.xpose.msra.mxu0 0.0
        %495 = vmatpush.xpose.msra.mxu0 %v478
        %496 = vmatmul.f32.gmra.mxu0 %v476
        %v497 = vpop.f32.mrf.mxu0
        %v498 = vadd.f32 0.0, %v497
        %499 = vdwg.mxu0
        %501 = vrot.lane.b32.xlu0 %v417, 96
        %v502 = vpop.permute.xlu0 %501
        %v503 = vsel %vm267, %v502, 0
        %v505 = vsel %vm267, %v417, 0
        %507 = vmatpush.xpose.msra.mxu0 0.0
        %508 = vmatpush.xpose.msra.mxu0 0.0
        %509 = vmatpush.xpose.msra.mxu0 0.0
        %510 = vmatpush.xpose.msra.mxu0 0.0
        %511 = vmatpush.xpose.msra.mxu0 0.0
        %512 = vmatpush.xpose.msra.mxu0 0.0
        %513 = vmatpush.xpose.msra.mxu0 0.0
        %514 = vmatpush.xpose.msra.mxu0 0.0
        %515 = vmatpush.xpose.msra.mxu0 0.0
        %516 = vmatpush.xpose.msra.mxu0 0.0
        %517 = vmatpush.xpose.msra.mxu0 0.0
        %518 = vmatpush.xpose.msra.mxu0 0.0
        %519 = vmatpush.xpose.msra.mxu0 0.0
        %520 = vmatpush.xpose.msra.mxu0 0.0
        %521 = vmatpush.xpose.msra.mxu0 0.0
        %522 = vmatpush.xpose.msra.mxu0 %v505
        %523 = vmatmul.f32.gmra.mxu0 %v503
        %v524 = vpop.f32.mrf.mxu0
        %v525 = vadd.f32 0.0, %v524
        %526 = vdwg.mxu0
        %vm527 = vcmask 64512
        %v528 = vsel %vm527, %v444, -inf
        %529 = vmax.xlane.f32.xlu0 %v528
        %v530 = vpop.xlane.xlu0 %529
        %v531 = vsel %vm527, %v471, -inf
        %532 = vmax.xlane.f32.xlu0 %v531
        %v533 = vpop.xlane.xlu0 %532
        %v534 = vsel %vm527, %v498, -inf
        %535 = vmax.xlane.f32.xlu0 %v534
        %v536 = vpop.xlane.xlu0 %535
        %v537 = vsel %vm527, %v525, -inf
        %538 = vmax.xlane.f32.xlu0 %v537
        %v539 = vpop.xlane.xlu0 %538
        %v540 = vsub.f32 %v444, %v530
        %v541 = vsub.f32 %v471, %v533
        %v542 = vsub.f32 %v498, %v536
        %v543 = vsub.f32 %v525, %v539
        %v544 = vmul.f32 %v540, 1.442695
        %v545 = vpow.pop %v544
        %v546 = vmul.f32 %v541, 1.442695
        %v547 = vpow.pop %v546
        %v548 = vmul.f32 %v542, 1.442695
        %v549 = vpow.pop %v548
        %v550 = vmul.f32 %v543, 1.442695
        %v551 = vpow.pop %v550
        %v552 = vsel %vm527, %v545, 0.0
        %553 = vadd.xlane.f32.xlu0 %v552
        %v554 = vpop.xlane.xlu0 %553
        %v555 = vsel %vm527, %v547, 0.0
        %556 = vadd.xlane.f32.xlu0 %v555
        %v557 = vpop.xlane.xlu0 %556
        %v558 = vsel %vm527, %v549, 0.0
        %559 = vadd.xlane.f32.xlu0 %v558
        %v560 = vpop.xlane.xlu0 %559
        %v561 = vsel %vm527, %v551, 0.0
        %562 = vadd.xlane.f32.xlu0 %v561
        %v563 = vpop.xlane.xlu0 %562
        %v564 = vrcp.pop %v554
        %v565 = vmul.f32 %v554, %v564
        %v566 = vsub.f32 1.0, %v565
        %v567 = vmul.f32 %v564, %v566
        %v568 = vadd.f32 %v564, %v567
        %vm569 = vweird.f32 %v554
        %vm570 = vweird.f32 %v564
        %vm571 = vmor %vm569, %vm570
        %v572 = vsel %vm571, %v564, %v568
        %v573 = vand.u32 2147483647, %v554
        %vm574 = vcmp.eq.f32.partialorder %v573, 8.507059e+37
        %v575 = vand.u32 %v554, 2147483648
        %v576 = vor.u32 1.1754944e-38, %v575
        %v577 = vsel %vm574, %v576, %v572
        %v578 = vrcp.pop %v557
        %v579 = vmul.f32 %v557, %v578
        %v580 = vsub.f32 1.0, %v579
        %v581 = vmul.f32 %v578, %v580
        %v582 = vadd.f32 %v578, %v581
        %vm583 = vweird.f32 %v557
        %vm584 = vweird.f32 %v578
        %vm585 = vmor %vm583, %vm584
        %v586 = vsel %vm585, %v578, %v582
        %v587 = vand.u32 2147483647, %v557
        %vm588 = vcmp.eq.f32.partialorder %v587, 8.507059e+37
        %v589 = vand.u32 %v557, 2147483648
        %v590 = vor.u32 1.1754944e-38, %v589
        %v591 = vsel %vm588, %v590, %v586
        %v592 = vrcp.pop %v560
        %v593 = vmul.f32 %v560, %v592
        %v594 = vsub.f32 1.0, %v593
        %v595 = vmul.f32 %v592, %v594
        %v596 = vadd.f32 %v592, %v595
        %vm597 = vweird.f32 %v560
        %vm598 = vweird.f32 %v592
        %vm599 = vmor %vm597, %vm598
        %v600 = vsel %vm599, %v592, %v596
        %v601 = vand.u32 2147483647, %v560
        %vm602 = vcmp.eq.f32.partialorder %v601, 8.507059e+37
        %v603 = vand.u32 %v560, 2147483648
        %v604 = vor.u32 1.1754944e-38, %v603
        %v605 = vsel %vm602, %v604, %v600
        %v606 = vrcp.pop %v563
        %v607 = vmul.f32 %v563, %v606
        %v608 = vsub.f32 1.0, %v607
        %v609 = vmul.f32 %v606, %v608
        %v610 = vadd.f32 %v606, %v609
        %vm611 = vweird.f32 %v563
        %vm612 = vweird.f32 %v606
        %vm613 = vmor %vm611, %vm612
        %v614 = vsel %vm613, %v606, %v610
        %v615 = vand.u32 2147483647, %v563
        %vm616 = vcmp.eq.f32.partialorder %v615, 8.507059e+37
        %v617 = vand.u32 %v563, 2147483648
        %v618 = vor.u32 1.1754944e-38, %v617
        %v619 = vsel %vm616, %v618, %v614
        %v620 = vmul.f32 %v545, %v577
        %v621 = vmul.f32 %v547, %v591
        %v622 = vmul.f32 %v549, %v605
        %v623 = vmul.f32 %v551, %v619
        %624 = vrot.lane.b32.xlu0 %v408, 64
        %v625 = vpop.permute.xlu0 %624
        %v628 = vsel %vm527, %v620, 0
        %630 = vmatpush.msra.mxu0 0.0
        %631 = vmatpush.msra.mxu0 0.0
        %632 = vmatpush.msra.mxu0 0.0
        %633 = vmatpush.msra.mxu0 0.0
        %634 = vmatpush.msra.mxu0 0.0
        %635 = vmatpush.msra.mxu0 0.0
        %636 = vmatpush.msra.mxu0 0.0
        %637 = vmatpush.msra.mxu0 0.0
        %638 = vmatpush.msra.mxu0 0.0
        %639 = vmatpush.msra.mxu0 0.0
        %640 = vmatpush.msra.mxu0 0.0
        %641 = vmatpush.msra.mxu0 0.0
        %642 = vmatpush.msra.mxu0 0.0
        %643 = vmatpush.msra.mxu0 0.0
        %644 = vmatpush.msra.mxu0 0.0
        %645 = vmatpush.msra.mxu0 %v625
        %646 = vmatmul.f32.gmra.mxu0 %v628
        %v647 = vpop.f32.mrf.mxu0
        %v648 = vadd.f32 0.0, %v647
        %649 = vdwg.mxu0
        %650 = vrot.lane.b32.xlu0 %v411, 64
        %v651 = vpop.permute.xlu0 %650
        %v654 = vsel %vm527, %v621, 0
        %656 = vmatpush.msra.mxu0 0.0
        %657 = vmatpush.msra.mxu0 0.0
        %658 = vmatpush.msra.mxu0 0.0
        %659 = vmatpush.msra.mxu0 0.0
        %660 = vmatpush.msra.mxu0 0.0
        %661 = vmatpush.msra.mxu0 0.0
        %662 = vmatpush.msra.mxu0 0.0
        %663 = vmatpush.msra.mxu0 0.0
        %664 = vmatpush.msra.mxu0 0.0
        %665 = vmatpush.msra.mxu0 0.0
        %666 = vmatpush.msra.mxu0 0.0
        %667 = vmatpush.msra.mxu0 0.0
        %668 = vmatpush.msra.mxu0 0.0
        %669 = vmatpush.msra.mxu0 0.0
        %670 = vmatpush.msra.mxu0 0.0
        %671 = vmatpush.msra.mxu0 %v651
        %672 = vmatmul.f32.gmra.mxu0 %v654
        %v673 = vpop.f32.mrf.mxu0
        %v674 = vadd.f32 0.0, %v673
        %675 = vdwg.mxu0
        %676 = vrot.lane.b32.xlu0 %v414, 64
        %v677 = vpop.permute.xlu0 %676
        %v680 = vsel %vm527, %v622, 0
        %682 = vmatpush.msra.mxu0 0.0
        %683 = vmatpush.msra.mxu0 0.0
        %684 = vmatpush.msra.mxu0 0.0
        %685 = vmatpush.msra.mxu0 0.0
        %686 = vmatpush.msra.mxu0 0.0
        %687 = vmatpush.msra.mxu0 0.0
        %688 = vmatpush.msra.mxu0 0.0
        %689 = vmatpush.msra.mxu0 0.0
        %690 = vmatpush.msra.mxu0 0.0
        %691 = vmatpush.msra.mxu0 0.0
        %692 = vmatpush.msra.mxu0 0.0
        %693 = vmatpush.msra.mxu0 0.0
        %694 = vmatpush.msra.mxu0 0.0
        %695 = vmatpush.msra.mxu0 0.0
        %696 = vmatpush.msra.mxu0 0.0
        %697 = vmatpush.msra.mxu0 %v677
        %698 = vmatmul.f32.gmra.mxu0 %v680
        %v699 = vpop.f32.mrf.mxu0
        %v700 = vadd.f32 0.0, %v699
        %701 = vdwg.mxu0
        %702 = vrot.lane.b32.xlu0 %v417, 64
        %v703 = vpop.permute.xlu0 %702
        %v706 = vsel %vm527, %v623, 0
        %708 = vmatpush.msra.mxu0 0.0
        %709 = vmatpush.msra.mxu0 0.0
        %710 = vmatpush.msra.mxu0 0.0
        %711 = vmatpush.msra.mxu0 0.0
        %712 = vmatpush.msra.mxu0 0.0
        %713 = vmatpush.msra.mxu0 0.0
        %714 = vmatpush.msra.mxu0 0.0
        %715 = vmatpush.msra.mxu0 0.0
        %716 = vmatpush.msra.mxu0 0.0
        %717 = vmatpush.msra.mxu0 0.0
        %718 = vmatpush.msra.mxu0 0.0
        %719 = vmatpush.msra.mxu0 0.0
        %720 = vmatpush.msra.mxu0 0.0
        %721 = vmatpush.msra.mxu0 0.0
        %722 = vmatpush.msra.mxu0 0.0
        %723 = vmatpush.msra.mxu0 %v703
        %724 = vmatmul.f32.gmra.mxu0 %v706
        %v725 = vpop.f32.mrf.mxu0
        %v726 = vadd.f32 0.0, %v725
        %727 = vdwg.mxu0
        %v728 = vld [vmem:[#allocation2] sm:$0xff]
        %v729 = vld [vmem:[#allocation2 + $0x8] sm:$0xff]
        %v730 = vld [vmem:[#allocation2 + $0x10] sm:$0xff]
        %v731 = vld [vmem:[#allocation2 + $0x18] sm:$0xff]
        %v732 = vperm.slane %v265, 0
        %v734 = vsel %vm267, %v648, 0
        %v737 = vsel %vm267, %v674, 0
        %v740 = vsel %vm267, %v700, 0
        %v743 = vsel %vm267, %v726, 0
        %745 = vmatpush.msra.mxu0 0.0
        %746 = vmatpush.msra.mxu0 0.0
        %747 = vmatpush.msra.mxu0 0.0
        %748 = vmatpush.msra.mxu0 0.0
        %749 = vmatpush.msra.mxu0 0.0
        %750 = vmatpush.msra.mxu0 0.0
        %751 = vmatpush.msra.mxu0 0.0
        %752 = vmatpush.msra.mxu0 0.0
        %753 = vmatpush.msra.mxu0 0.0
        %754 = vmatpush.msra.mxu0 0.0
        %755 = vmatpush.msra.mxu0 0.0
        %756 = vmatpush.msra.mxu0 0.0
        %757 = vmatpush.msra.mxu0 %v731
        %758 = vmatpush.msra.mxu0 %v730
        %759 = vmatpush.msra.mxu0 %v729
        %760 = vmatpush.msra.mxu0 %v728
        %761 = vmatmul.f32.gmra.mxu0 %v734
        %v762 = vpop.f32.mrf.mxu0
        %v763 = vadd.f32 %v732, %v762
        %764 = vmatmul.f32.gmra.mxu0 %v737
        %v765 = vpop.f32.mrf.mxu0
        %v766 = vadd.f32 %v732, %v765
        %767 = vmatmul.f32.gmra.mxu0 %v740
        %v768 = vpop.f32.mrf.mxu0
        %v769 = vadd.f32 %v732, %v768
        %770 = vmatmul.f32.gmra.mxu0 %v743
        %v771 = vpop.f32.mrf.mxu0
        %v772 = vadd.f32 %v732, %v771
        %773 = vdwg.mxu0
        %vm774 = vcmp.gt.f32.partialorder %v763, 0.0
        %vm775 = vcmp.gt.f32.partialorder %v766, 0.0
        %vm776 = vcmp.gt.f32.partialorder %v769, 0.0
        %vm777 = vcmp.gt.f32.partialorder %v772, 0.0
        %v778 = vmul.f32 %v763, 0.1
        %v779 = vmul.f32 %v766, 0.1
        %v780 = vmul.f32 %v769, 0.1
        %v781 = vmul.f32 %v772, 0.1
        %v782 = vsel %vm774, %v763, %v778
        %v783 = vsel %vm775, %v766, %v779
        %v784 = vsel %vm776, %v769, %v780
        %v785 = vsel %vm777, %v772, %v781
        %v786 = vld [vmem:[%s3] sm:$0xff]
        %v787 = vld [vmem:[%s3 + $0x8] sm:$0xff]
        %v788 = vld [vmem:[%s3 + $0x10] sm:$0xff]
        %v789 = vld [vmem:[%s3 + $0x18] sm:$0xff]
        %v790 = vld [vmem:[%s3 + $0x20] sm:$0xff]
        %v791 = vld [vmem:[%s3 + $0x28] sm:$0xff]
        %v792 = vld [vmem:[%s3 + $0x30] sm:$0xff]
        %v793 = vld [vmem:[%s3 + $0x38] sm:$0xff]
        %v794 = vld [vmem:[%s3 + $0x40] sm:$0xff]
        %v795 = vld [vmem:[%s3 + $0x48] sm:$0xff]
        %v796 = vld [vmem:[%s3 + $0x50] sm:$0xff]
        %v797 = vld [vmem:[%s3 + $0x58] sm:$0xff]
        %v798 = vld [vmem:[%s3 + $0x60] sm:$0xff]
        %v799 = vld [vmem:[%s3 + $0x68] sm:$0xff]
        %v800 = vld [vmem:[%s3 + $0x70] sm:$0xff]
        %v801 = vld [vmem:[%s3 + $0x78] sm:$0xff]
        %v802 = vperm.slane %v266, 0
        %803 = vmatpush.msra.mxu0 %v801
        %804 = vmatpush.msra.mxu0 %v800
        %805 = vmatpush.msra.mxu0 %v799
        %806 = vmatpush.msra.mxu0 %v798
        %807 = vmatpush.msra.mxu0 %v797
        %808 = vmatpush.msra.mxu0 %v796
        %809 = vmatpush.msra.mxu0 %v795
        %810 = vmatpush.msra.mxu0 %v794
        %811 = vmatpush.msra.mxu0 %v793
        %812 = vmatpush.msra.mxu0 %v792
        %813 = vmatpush.msra.mxu0 %v791
        %814 = vmatpush.msra.mxu0 %v790
        %815 = vmatpush.msra.mxu0 %v789
        %816 = vmatpush.msra.mxu0 %v788
        %817 = vmatpush.msra.mxu0 %v787
        %818 = vmatpush.msra.mxu0 %v786
        %819 = vmatmul.f32.gmra.mxu0 %v782
        %v820 = vpop.f32.mrf.mxu0
        %v821 = vadd.f32 %v802, %v820
        %822 = vmatmul.f32.gmra.mxu0 %v783
        %v823 = vpop.f32.mrf.mxu0
        %v824 = vadd.f32 %v802, %v823
        %825 = vmatmul.f32.gmra.mxu0 %v784
        %v826 = vpop.f32.mrf.mxu0
        %v827 = vadd.f32 %v802, %v826
        %828 = vmatmul.f32.gmra.mxu0 %v785
        %v829 = vpop.f32.mrf.mxu0
        %v830 = vadd.f32 %v802, %v829
        %831 = vdwg.mxu0
        %v832 = vadd.f32 %v821, %v369
        %v833 = vadd.f32 %v824, %v370
        %v834 = vadd.f32 %v827, %v371
        %v835 = vadd.f32 %v830, %v372
        %836 = vst.msk [vmem:[%s250] sm:$0xff] %vm267, %v832
        %837 = vst.msk [vmem:[%s250 + $0x8] sm:$0xff] %vm267, %v833
        %838 = vst.msk [vmem:[%s250 + $0x10] sm:$0xff] %vm267, %v834
        %839 = vst.msk [vmem:[%s250 + $0x18] sm:$0xff] %vm267, %v835
        %s840 = sand.u32 %s139, 1
        %s841 = scalar_lea.sflag [#allocation4], %s840
        %s842 = sand.u32 %s139, 1
        %s843 = smul.addr %s842, 32
        %s844 = scalar_lea.vmem [#allocation7], %s843
        // Predicated region
        $region49: #{tpu_custom_call.1} parent=39 // pred_check
          %p845 = pneg %p149
        $region50: #{tpu_custom_call.1} parent=39 // pred_check_branch
          %847 = sbr.rel (%p845) target = $region52
        $region51: #{tpu_custom_call.1} parent=39 // pred_region
          %s848 = smul.u32 4, %s21
          %850 = vsyncadd %s841, 0
          %s851 = smul.addr %s848, 8
          %s852 = scalar_lea.hbm %s5, %s851
          %s853 = sshll.u32 %s844, 4
          %s854 = int_to_ptr.vmem [resolvable:$true] %s853
          %s855 = sshll.u32 %s852, 4
          %s856 = int_to_ptr.hbm [resolvable:$true] %s855
          %861 = dma.vmem_to_hbm [thread:$0]  %s854, 512, %s856, %s841, 128, 128, 8
        $region52: #{tpu_custom_call.1} parent=39 // pred_fallthru
          _
      $region40: #{tpu_custom_call.1} parent=5 // pred_fallthru
        _
      %p862 = scmp.le.s32.totalorder 2, %s16
      // Predicated region
      $region53: #{tpu_custom_call.1} parent=5 // pred_check
        %p863 = pneg %p862
      $region54: #{tpu_custom_call.1} parent=5 // pred_check_branch
        %865 = sbr.rel (%p863) target = $region56
      $region55: #{tpu_custom_call.1} parent=5 // pred_region
        %s866 = ssub.s32 %s16, 2
        // Predicated region
        $region57: #{tpu_custom_call.1} parent=55 // pred_check
          %p867 = pneg %p155
        $region58: #{tpu_custom_call.1} parent=55 // pred_check_branch
          %869 = sbr.rel (%p867) target = $region60
        $region59: #{tpu_custom_call.1} parent=55 // pred_region
          %s870 = sand.u32 %s140, 1
          %s871 = scalar_lea.sflag [#allocation4], %s870
          %s872 = sand.u32 %s140, 1
          %s873 = smul.addr %s872, 32
          %s874 = scalar_lea.vmem [#allocation7], %s873
          %876 = dma.done %s871, 512
        $region60: #{tpu_custom_call.1} parent=55 // pred_fallthru
          _
      $region56: #{tpu_custom_call.1} parent=5 // pred_fallthru
        _
    $region6: #{tpu_custom_call.1} parent=1 // loop_footer
      %s20 = sadd.s32 1, %s16
    $region7: #{tpu_custom_call.1} parent=1 // loop_footer_branch
      %15 = sbr.rel target = $region3
    $region8: #{tpu_custom_call.1} parent=1 // loop_exit
      _
    %877 = vsyncpa [#allocation3], 1
    %s878 = scalar_lea.sflag [#allocation3], 1
    %879 = vsyncpa %s878, 1
    %880 = vsyncpa [#allocation6], 1
    %881 = vsyncpa [#allocation4], 1
    %s882 = scalar_lea.sflag [#allocation4], 1
    %883 = vsyncpa %s882, 1

</llo_original>
